<compile_context>
chip_gen: v6e
topology: v6e:2x2x1
jax: 0.10.0
libtpu: 0.0.40
codegen_flags: <defaults>
</compile_context>

<pallas_src>
import jax
import jax.numpy as jnp
from jax import lax
from jax.experimental import pallas as pl
from jax.experimental.pallas import tpu as pltpu


def _round_up(x, m):
    return ((x + m - 1) // m) * m


def _unlikelihood_tile_kernel(outs_ref, labels_ref, cm_ref, part_ref):
    """One batch tile -> partial (total, count).

    outs_ref, labels_ref : [TB, Cpad] f32 (zero-padded)
    cm_ref               : [Cpad, Cpad] f32 (zero-padded, resident across grid)
    part_ref             : [8, 128] f32; sublane 0 = partial total,
                           sublane 1 = partial active-row count.
    """
    outs = outs_ref[...]
    pos = labels_ref[...]
    cm = cm_ref[...]

    # log(1 - p + eps), masked to non-positive classes only (EUP + VPU).
    prob = jnp.log(1.0 - outs + 1e-5)
    prob_mask = prob * (1.0 - pos)

    # Contract the class dim of both operands on the MXU:
    # equivalent to prob_mask @ cm.T without materializing the transpose.
    ull = lax.dot_general(
        prob_mask, cm,
        dimension_numbers=(((1,), (1,)), ((), ())),
        preferred_element_type=jnp.float32)
    ull = -ull * pos

    row_sum = jnp.sum(ull, axis=1, keepdims=True)                        # [TB,1]
    dividor = jnp.sum((ull > 0.0).astype(jnp.float32), axis=1,
                      keepdims=True)                                     # [TB,1]

    active = row_sum > 0.0                                               # [TB,1]
    per_row = jnp.where(active, row_sum / jnp.where(active, dividor, 1.0), 0.0)

    total = jnp.sum(per_row, axis=0, keepdims=True)                      # [1,1]
    count = jnp.sum(active.astype(jnp.float32), axis=0, keepdims=True)   # [1,1]

    # Lane-dense partial output block: total on sublane 0, count on sublane 1.
    sub = lax.broadcasted_iota(jnp.int32, (8, 128), 0)
    part_ref[...] = jnp.where(sub == 0, total,
                              jnp.where(sub == 1, count, 0.0))


def unlikelihood_bce_loss(outs, labels, contradicted_matrix,
                          cost_style="mean", tb=None):
    """outs, labels: [B, C]; contradicted_matrix: [C, C]. Returns scalar loss."""
    B, C = outs.shape

    # Lane-dense class dim.
    c_pad = _round_up(max(C, 1), 128)

    # Batch tile height. Big tiles amortize per-grid-step overhead; cap the
    # footprint so double-buffered inputs + resident CM fit comfortably in
    # v7x's 64 MiB (32 MiB scoped-default) VMEM.
    if tb is None:
        tb = min(512, _round_up(B, 8))
    tb = max(8, _round_up(tb, 8))
    budget = 24 << 20  # bytes for (2 inputs x 2 bufs) + 2x resident CM
    while tb > 8 and (4 * tb * c_pad * 4 + 2 * c_pad * c_pad * 4) > budget:
        tb //= 2
        tb = max(8, (tb // 8) * 8)

    b_pad = _round_up(B, tb)
    num_tiles = b_pad // tb

    f32 = jnp.float32
    outs_p = jnp.pad(outs.astype(f32), ((0, b_pad - B), (0, c_pad - C)))
    labels_p = jnp.pad(labels.astype(f32), ((0, b_pad - B), (0, c_pad - C)))
    cm_p = jnp.pad(contradicted_matrix.astype(f32),
                   ((0, c_pad - C), (0, c_pad - C)))

    # Explicit VMEM limit with headroom (re-derived per shape; safe on v7x).
    tile_bytes = tb * c_pad * 4
    cm_bytes = c_pad * c_pad * 4
    needed = 2 * (2 * tile_bytes) + 2 * cm_bytes + 2 * (8 * 128 * 4)
    vmem_limit = int(min(max(2 * needed, 16 << 20), 48 << 20))

    grid_spec = pltpu.PrefetchScalarGridSpec(
        num_scalar_prefetch=0,
        grid=(num_tiles,),
        in_specs=[
            pl.BlockSpec((tb, c_pad), lambda i: (i, 0)),
            pl.BlockSpec((tb, c_pad), lambda i: (i, 0)),
            pl.BlockSpec((c_pad, c_pad), lambda i: (0, 0)),  # resident CM
        ],
        out_specs=pl.BlockSpec((8, 128), lambda i: (i, 0)),
    )

    parts = pl.pallas_call(
        _unlikelihood_tile_kernel,
        out_shape=jax.ShapeDtypeStruct((num_tiles * 8, 128), jnp.float32),
        grid_spec=grid_spec,
        compiler_params=pltpu.CompilerParams(
            dimension_semantics=("parallel",),
            vmem_limit_bytes=vmem_limit),
    )(outs_p, labels_p, cm_p)

    total = jnp.sum(parts[0::8, 0])
    count = jnp.sum(parts[1::8, 0])

    if cost_style == "sum":
        return total
    # mean over active rows; count==0 -> NaN (matches torch.mean of an empty
    # selection in the reference module).
    return total / count


def _reference(outs, labels, cm, cost_style="mean"):
    """Pure-JAX reference for sanity checking."""
    pos = labels.astype(jnp.float32)
    prob = jnp.log(1.0 - outs + 1e-5)
    prob_mask = prob * (1.0 - pos)
    ull = -(prob_mask @ cm.T) * pos
    s = jnp.sum(ull, axis=1)
    d = jnp.sum((ull > 0).astype(jnp.float32), axis=1)
    active = s > 0
    per_row = jnp.where(active, s / jnp.where(active, d, 1.0), 0.0)
    total = jnp.sum(per_row)
    count = jnp.sum(active.astype(jnp.float32))
    return total if cost_style == "sum" else total / count


if __name__ == "__main__":
    # Small demo shapes (exercise both class padding 75->128 and batch
    # padding/tiling 50 -> 4 tiles of 16).
    B, C = 50, 75

    key = jax.random.PRNGKey(0)
    k1, k2 = jax.random.split(key)

    # outs: probabilities in (0, 1); labels: multi-hot binary targets.
    outs = jax.nn.sigmoid(jax.random.normal(k1, (B, C), dtype=jnp.float32))
    labels = (jax.random.uniform(k2, (B, C)) < 0.3).astype(jnp.float32)

    # Deterministic synthetic contradicted_matrix [C, C] (binary, no diagonal).
    idx = jnp.arange(C)
    contradicted_matrix = (
        (((idx[:, None] + idx[None, :]) % 5) == 0) & (idx[:, None] != idx[None, :])
    ).astype(jnp.float32)

    ok = True
    for style in ("mean", "sum"):
        loss = unlikelihood_bce_loss(outs, labels, contradicted_matrix,
                                     cost_style=style, tb=16)
        loss = jax.block_until_ready(loss)
        ref = _reference(outs, labels, contradicted_matrix, cost_style=style)
        ok = ok and bool(jnp.allclose(loss, ref, rtol=2e-4, atol=1e-5))
        assert ok, (style, loss, ref)

    print("KERNEL_OK")
</pallas_src>

<mosaic_0001>
module attributes {stable_mosaic.version = 11 : i64} {
  func.func @_unlikelihood_tile_kernel(%arg0: i32, %arg1: memref<16x128xf32, #tpu.memory_space<vmem>>, %arg2: memref<16x128xf32, #tpu.memory_space<vmem>>, %arg3: memref<128x128xf32, #tpu.memory_space<vmem>>, %arg4: memref<8x128xf32, #tpu.memory_space<vmem>>) attributes {dimension_semantics = [#tpu.dimension_semantics<parallel>], iteration_bounds = array<i64: 4>, scalar_prefetch = 0 : i64, scratch_operands = 0 : i64, tpu.core_type = #tpu.core_type<tc>, window_params = [{transform_indices = @transform_0, window_bounds = array<i64: 16, 128>}, {transform_indices = @transform_1, window_bounds = array<i64: 16, 128>}, {pipeline_mode = #tpu.pipeline_mode<synchronous>, transform_indices = @transform_2, window_bounds = array<i64: 128, 128>}, {transform_indices = @transform_3, window_bounds = array<i64: 8, 128>}]} {
    %c0 = arith.constant 0 : index
    %c0_0 = arith.constant 0 : index
    %0 = vector.load %arg1[%c0, %c0_0] : memref<16x128xf32, #tpu.memory_space<vmem>>, vector<16x128xf32>
    %c0_1 = arith.constant 0 : index
    %c0_2 = arith.constant 0 : index
    %1 = vector.load %arg2[%c0_1, %c0_2] : memref<16x128xf32, #tpu.memory_space<vmem>>, vector<16x128xf32>
    %c0_3 = arith.constant 0 : index
    %c0_4 = arith.constant 0 : index
    %2 = vector.load %arg3[%c0_3, %c0_4] : memref<128x128xf32, #tpu.memory_space<vmem>>, vector<128x128xf32>
    %cst = arith.constant 1.000000e+00 : f32
    %3 = vector.broadcast %cst : f32 to vector<16x128xf32>
    %4 = arith.subf %3, %0 : vector<16x128xf32>
    %cst_5 = arith.constant 9.99999974E-6 : f32
    %5 = vector.broadcast %cst_5 : f32 to vector<16x128xf32>
    %6 = arith.addf %4, %5 : vector<16x128xf32>
    %7 = math.log %6 : vector<16x128xf32>
    %cst_6 = arith.constant 1.000000e+00 : f32
    %8 = vector.broadcast %cst_6 : f32 to vector<16x128xf32>
    %9 = arith.subf %8, %1 : vector<16x128xf32>
    %10 = arith.mulf %7, %9 : vector<16x128xf32>
    %cst_7 = arith.constant dense<0.000000e+00> : vector<16x128xf32>
    %11 = tpu.matmul %10, %2, %cst_7 {dimension_numbers = #tpu.dot_dimension_numbers<[1], [1], [0], [0], [0, 0, 1, 0], [], []>} : vector<16x128xf32>, vector<128x128xf32>, vector<16x128xf32> -> vector<16x128xf32>
    %cst_8 = arith.constant 0.000000e+00 : f32
    %12 = vector.broadcast %cst_8 : f32 to vector<16x128xf32>
    %13 = arith.subf %12, %11 : vector<16x128xf32>
    %14 = arith.mulf %13, %1 : vector<16x128xf32>
    %cst_9 = arith.constant dense<0.000000e+00> : vector<16xf32>
    %15 = vector.multi_reduction <add>, %14, %cst_9 [1] : vector<16x128xf32> to vector<16xf32>
    %16 = vector.shape_cast %15 : vector<16xf32> to vector<16x1xf32>
    %cst_10 = arith.constant 0.000000e+00 : f32
    %17 = vector.broadcast %cst_10 : f32 to vector<16x128xf32>
    %18 = arith.cmpf ogt, %14, %17 : vector<16x128xf32>
    %19 = arith.extui %18 : vector<16x128xi1> to vector<16x128xi32>
    %20 = arith.sitofp %19 : vector<16x128xi32> to vector<16x128xf32>
    %cst_11 = arith.constant dense<0.000000e+00> : vector<16xf32>
    %21 = vector.multi_reduction <add>, %20, %cst_11 [1] : vector<16x128xf32> to vector<16xf32>
    %22 = vector.shape_cast %21 : vector<16xf32> to vector<16x1xf32>
    %cst_12 = arith.constant 0.000000e+00 : f32
    %23 = vector.broadcast %cst_12 : f32 to vector<16x1xf32>
    %24 = arith.cmpf ogt, %16, %23 : vector<16x1xf32>
    %cst_13 = arith.constant 1.000000e+00 : f32
    %25 = vector.broadcast %cst_13 : f32 to vector<16x1xf32>
    %26 = arith.select %24, %22, %25 : vector<16x1xi1>, vector<16x1xf32>
    %27 = arith.divf %16, %26 : vector<16x1xf32>
    %cst_14 = arith.constant 0.000000e+00 : f32
    %28 = vector.broadcast %cst_14 : f32 to vector<16x1xf32>
    %29 = arith.select %24, %27, %28 : vector<16x1xi1>, vector<16x1xf32>
    %cst_15 = arith.constant dense<0.000000e+00> : vector<1xf32>
    %30 = vector.multi_reduction <add>, %29, %cst_15 [0] : vector<16x1xf32> to vector<1xf32>
    %31 = vector.shape_cast %30 : vector<1xf32> to vector<1x1xf32>
    %32 = arith.extui %24 : vector<16x1xi1> to vector<16x1xi32>
    %33 = arith.sitofp %32 : vector<16x1xi32> to vector<16x1xf32>
    %cst_16 = arith.constant dense<0.000000e+00> : vector<1xf32>
    %34 = vector.multi_reduction <add>, %33, %cst_16 [0] : vector<16x1xf32> to vector<1xf32>
    %35 = vector.shape_cast %34 : vector<1xf32> to vector<1x1xf32>
    %36 = tpu.iota {dimensions = array<i32: 0>} : vector<8x128xi32>
    %c0_i32 = arith.constant 0 : i32
    %37 = vector.broadcast %c0_i32 : i32 to vector<8x128xi32>
    %38 = arith.cmpi eq, %36, %37 : vector<8x128xi32>
    %c1_i32 = arith.constant 1 : i32
    %39 = vector.broadcast %c1_i32 : i32 to vector<8x128xi32>
    %40 = arith.cmpi eq, %36, %39 : vector<8x128xi32>
    %cst_17 = arith.constant 0.000000e+00 : f32
    %41 = vector.shape_cast %35 : vector<1x1xf32> to vector<1x1xf32>
    %42 = vector.broadcast %41 : vector<1x1xf32> to vector<8x128xf32>
    %43 = vector.broadcast %cst_17 : f32 to vector<8x128xf32>
    %44 = arith.select %40, %42, %43 : vector<8x128xi1>, vector<8x128xf32>
    %45 = vector.shape_cast %31 : vector<1x1xf32> to vector<1x1xf32>
    %46 = vector.broadcast %45 : vector<1x1xf32> to vector<8x128xf32>
    %47 = arith.select %38, %46, %44 : vector<8x128xi1>, vector<8x128xf32>
    %c0_18 = arith.constant 0 : index
    %c0_19 = arith.constant 0 : index
    %48 = vector.load %arg4[%c0_18, %c0_19] : memref<8x128xf32, #tpu.memory_space<vmem>>, vector<8x128xf32>
    tpu.vector_store %arg4[%c0_18, %c0_19], %47 {strides = array<i32>} : memref<8x128xf32, #tpu.memory_space<vmem>>, vector<8x128xf32>,
    return
  }
  func.func @transform_0(%arg0: i32) -> (i32, i32) {
    %c0_i32 = arith.constant 0 : i32
    %c0_i32_0 = arith.constant 0 : i32
    return %arg0, %c0_i32 : i32, i32
  }
  func.func @transform_1(%arg0: i32) -> (i32, i32) {
    %c0_i32 = arith.constant 0 : i32
    %c0_i32_0 = arith.constant 0 : i32
    return %arg0, %c0_i32 : i32, i32
  }
  func.func @transform_2(%arg0: i32) -> (i32, i32) {
    %c0_i32 = arith.constant 0 : i32
    %c0_i32_0 = arith.constant 0 : i32
    %c0_i32_1 = arith.constant 0 : i32
    return %c0_i32, %c0_i32_0 : i32, i32
  }
  func.func @transform_3(%arg0: i32) -> (i32, i32) {
    %c0_i32 = arith.constant 0 : i32
    %c0_i32_0 = arith.constant 0 : i32
    return %arg0, %c0_i32 : i32, i32
  }
}

</mosaic_0001>

<llo_original>
// kernel: tpu_custom_call.1
$region0: #{tpu_custom_call.1}
  #allocation0 [shape = 'u32[]', space=smem, size = 0x4, offset = 0x4, fixed_abs, tag = 'smem constant byte address 0x4 - core index']
  #allocation1 [shape = 'u32[144,128]{1,0:T(1,128)}', space=vmem, size = 0x12000, scoped, tag = 'internal scratch']
  %s0 = inlined_call_operand.hbm [shape: f32[64,128], index: 0, kind: input, shape index: {}]
  %s1 = inlined_call_operand.hbm [shape: f32[64,128], index: 1, kind: input, shape index: {}]
  %s2 = inlined_call_operand.hbm [shape: f32[128,128], index: 2, kind: input, shape index: {}]
  %s3 = inlined_call_operand.hbm [shape: f32[32,128], index: 3, kind: output, shape index: {}]
  %s4 = sld [smem:[#allocation0]]
  $region57: #{tpu_custom_call.1} parent=0
    _
  %s6 = ssub.s32 1, %s4
  %s7 = scalar_select 0, %s6, %s4
  $region1: #{tpu_custom_call.1} parent=0
    #allocation2 [shape = 'u8[16384]{0}', space=vmem, size = 0x4000, scoped, tag = 'input window, operand 0']
    #allocation3 [shape = 's32[2]{0}', space=sflag, size = 0x8, scoped, tag = 'scoped memory for tpu_custom_call.1']
    #allocation4 [shape = 's32[2]{0}', space=sflag, size = 0x8, scoped, tag = 'scoped memory for tpu_custom_call.1']
    #allocation5 [shape = 'u8[16384]{0}', space=vmem, size = 0x4000, scoped, tag = 'input window, operand 1']
    #allocation6 [shape = 's32[2]{0}', space=sflag, size = 0x8, scoped, tag = 'scoped memory for tpu_custom_call.1']
    #allocation7 [shape = 'u8[65536]{0}', space=vmem, size = 0x10000, scoped, tag = 'input window, operand 2, single buffered']
    #allocation8 [shape = 'u8[8192]{0}', space=vmem, size = 0x2000, scoped, tag = 'output window, operand 0']
    %8 = vsyncpa [#allocation3], 0
    %s9 = scalar_lea.sflag [#allocation3], 1
    %10 = vsyncpa %s9, 0
    %11 = vsyncpa [#allocation6], 0
    %s12 = scalar_lea.sflag [#allocation6], 1
    %13 = vsyncpa %s12, 0
    %14 = vsyncpa [#allocation4], 0
    %s15 = scalar_lea.sflag [#allocation4], 1
    %16 = vsyncpa %s15, 0
    loop: start=0, step=1, limit=6
    $region2: #{tpu_custom_call.1} parent=1 // loop_pre_header
      _
    $region3: #{tpu_custom_call.1} parent=1 // loop_header
      %s18 = sphi 0, %s22
      %p19 = scmp.ge.s32.totalorder %s18, 6
      %s28 = sphi 0, %s30
      %s31 = sphi 0, %s28
      %s32 = sphi 0, %s31
      %s48 = sphi 0, %s32
      %s54 = sphi 0, %s56
      %s57 = sphi 0, %s54
      %s58 = sphi 0, %s57
      %s74 = sphi 0, %s58
      %s78 = sphi 0, %s78
      %s80 = sphi 0, %s78
      %s81 = sphi 0, %s80
      %s95 = sphi 0, %s81
      %s101 = sphi 0, %s103
      %s104 = sphi 0, %s101
      %s105 = sphi 0, %s104
      %s121 = sphi 0, %s105
    $region4: #{tpu_custom_call.1} parent=1 // loop_header_branch
      %21 = sbr.rel (%p19) target = $region8
    $region5: #{tpu_custom_call.1} parent=1 // loop_body
      %s23 = ssub.s32 %s18, 1
      %s24 = ssub.s32 %s18, 2
      %s25 = sadd.s32 %s18, 1
      %s26 = ssub.s32 %s18, %s25
      %p27 = scmp.eq.s32.totalorder %s26, 0
      %s29 = sadd.s32 %s28, 1
      %s30 = scalar_select %p27, %s28, %s29
      %p33 = pneg %p27
      %p34 = scmp.eq.s32.totalorder %s18, 3
      %p35 = por %p33, %p34
      %p36 = scmp.ne.s32.totalorder %s28, %s31
      %p37 = scmp.eq.s32.totalorder %s18, 0
      %p38 = por %p36, %p37
      %p39 = scmp.ne.s32.totalorder %s28, %s31
      %p40 = scmp.eq.s32.totalorder %s23, 3
      %p41 = por %p39, %p40
      %p42 = scmp.ne.s32.totalorder %s31, %s32
      %p43 = scmp.eq.s32.totalorder %s23, 0
      %p44 = por %p42, %p43
      %p45 = scmp.ne.s32.totalorder %s31, %s32
      %p46 = scmp.eq.s32.totalorder %s24, 3
      %p47 = por %p45, %p46
      %p49 = scmp.ne.s32.totalorder %s32, %s48
      %p50 = scmp.eq.s32.totalorder %s24, 0
      %p51 = por %p49, %p50
      %s52 = ssub.s32 %s18, %s25
      %p53 = scmp.eq.s32.totalorder %s52, 0
      %s55 = sadd.s32 %s54, 1
      %s56 = scalar_select %p53, %s54, %s55
      %p59 = pneg %p53
      %p60 = scmp.eq.s32.totalorder %s18, 3
      %p61 = por %p59, %p60
      %p62 = scmp.ne.s32.totalorder %s54, %s57
      %p63 = scmp.eq.s32.totalorder %s18, 0
      %p64 = por %p62, %p63
      %p65 = scmp.ne.s32.totalorder %s54, %s57
      %p66 = scmp.eq.s32.totalorder %s23, 3
      %p67 = por %p65, %p66
      %p68 = scmp.ne.s32.totalorder %s57, %s58
      %p69 = scmp.eq.s32.totalorder %s23, 0
      %p70 = por %p68, %p69
      %p71 = scmp.ne.s32.totalorder %s57, %s58
      %p72 = scmp.eq.s32.totalorder %s24, 3
      %p73 = por %p71, %p72
      %p75 = scmp.ne.s32.totalorder %s58, %s74
      %p76 = scmp.eq.s32.totalorder %s24, 0
      %p77 = por %p75, %p76
      %s79 = sadd.s32 %s78, 1
      %p82 = scmp.eq.s32.totalorder %s18, 3
      %p83 = scmp.ne.s32.totalorder %s78, %s80
      %p84 = scmp.eq.s32.totalorder %s18, 0
      %p85 = por %p83, %p84
      %p86 = scmp.ne.s32.totalorder %s78, %s80
      %p87 = scmp.eq.s32.totalorder %s23, 3
      %p88 = por %p86, %p87
      %p89 = scmp.ne.s32.totalorder %s80, %s81
      %p90 = scmp.eq.s32.totalorder %s23, 0
      %p91 = por %p89, %p90
      %p92 = scmp.ne.s32.totalorder %s80, %s81
      %p93 = scmp.eq.s32.totalorder %s24, 3
      %p94 = por %p92, %p93
      %p96 = scmp.ne.s32.totalorder %s81, %s95
      %p97 = scmp.eq.s32.totalorder %s24, 0
      %p98 = por %p96, %p97
      %s99 = ssub.s32 %s18, %s25
      %p100 = scmp.eq.s32.totalorder %s99, 0
      %s102 = sadd.s32 %s101, 1
      %s103 = scalar_select %p100, %s101, %s102
      %p106 = pneg %p100
      %p107 = scmp.eq.s32.totalorder %s18, 3
      %p108 = por %p106, %p107
      %p109 = scmp.ne.s32.totalorder %s101, %s104
      %p110 = scmp.eq.s32.totalorder %s18, 0
      %p111 = por %p109, %p110
      %p112 = scmp.ne.s32.totalorder %s101, %s104
      %p113 = scmp.eq.s32.totalorder %s23, 3
      %p114 = por %p112, %p113
      %p115 = scmp.ne.s32.totalorder %s104, %s105
      %p116 = scmp.eq.s32.totalorder %s23, 0
      %p117 = por %p115, %p116
      %p118 = scmp.ne.s32.totalorder %s104, %s105
      %p119 = scmp.eq.s32.totalorder %s24, 3
      %p120 = por %p118, %p119
      %p122 = scmp.ne.s32.totalorder %s105, %s121
      %p123 = scmp.eq.s32.totalorder %s24, 0
      %p124 = por %p122, %p123
      %p125 = scmp.le.s32.totalorder 1, %s18
      %p126 = scmp.lt.s32.totalorder %s18, 5
      %p127 = pnand %p125, %p126
      %p128 = pneg %p127
      // Predicated region
      $region9: #{tpu_custom_call.1} parent=5 // pred_check
        _
      $region10: #{tpu_custom_call.1} parent=5 // pred_check_branch
        %130 = sbr.rel (%p127) target = $region12
      $region11: #{tpu_custom_call.1} parent=5 // pred_region
        %s131 = ssub.s32 %s18, 1
        // Predicated region
        $region13: #{tpu_custom_call.1} parent=11 // pred_check
          %p132 = pneg %p91
        $region14: #{tpu_custom_call.1} parent=11 // pred_check_branch
          %134 = sbr.rel (%p132) target = $region16
        $region15: #{tpu_custom_call.1} parent=11 // pred_region
          %s136 = ssub.s32 2048, 2048
          %137 = vsyncadd [#allocation6], %s136
          %s138 = sshll.u32 [#allocation7], 4
          %s139 = int_to_ptr.vmem [resolvable:$true] %s138
          %144 = dma.hbm_to_vmem [thread:$0]  %s2, 2048, %s139, [#allocation6], 128, 128, 8
        $region16: #{tpu_custom_call.1} parent=11 // pred_fallthru
          _
      $region12: #{tpu_custom_call.1} parent=5 // pred_fallthru
        _
      %p145 = scmp.lt.s32.totalorder %s18, 4
      // Predicated region
      $region17: #{tpu_custom_call.1} parent=5 // pred_check
        %p146 = pneg %p145
      $region18: #{tpu_custom_call.1} parent=5 // pred_check_branch
        %148 = sbr.rel (%p146) target = $region20
      $region19: #{tpu_custom_call.1} parent=5 // pred_region
        // Predicated region
        $region21: #{tpu_custom_call.1} parent=19 // pred_check
          %p149 = pneg %p38
        $region22: #{tpu_custom_call.1} parent=19 // pred_check_branch
          %151 = sbr.rel (%p149) target = $region24
        $region23: #{tpu_custom_call.1} parent=19 // pred_region
          %s152 = sand.u32 %s28, 1
          %s153 = scalar_lea.sflag [#allocation3], %s152
          %s154 = sand.u32 %s28, 1
          %s155 = smul.addr %s154, 16
          %s156 = scalar_lea.vmem [#allocation2], %s155
          %s157 = smul.u32 2, %s18
          %s159 = ssub.s32 256, 256
          %160 = vsyncadd %s153, %s159
          %s161 = smul.addr %s157, 128
          %s162 = scalar_lea.hbm %s0, %s161
          %s163 = sshll.u32 %s156, 4
          %s164 = int_to_ptr.vmem [resolvable:$true] %s163
          %169 = dma.hbm_to_vmem [thread:$0]  %s162, 256, %s164, %s153, 128, 128, 8
        $region24: #{tpu_custom_call.1} parent=19 // pred_fallthru
          _
        // Predicated region
        $region25: #{tpu_custom_call.1} parent=19 // pred_check
          %p170 = pneg %p64
        $region26: #{tpu_custom_call.1} parent=19 // pred_check_branch
          %172 = sbr.rel (%p170) target = $region28
        $region27: #{tpu_custom_call.1} parent=19 // pred_region
          %s173 = sand.u32 %s18, 1
          %s174 = scalar_lea.sflag [#allocation6], %s173
          %s175 = sand.u32 %s54, 1
          %s176 = smul.addr %s175, 16
          %s177 = scalar_lea.vmem [#allocation5], %s176
          %s178 = smul.u32 2, %s18
          %s180 = ssub.s32 256, 256
          %181 = vsyncadd %s174, %s180
          %s182 = smul.addr %s178, 128
          %s183 = scalar_lea.hbm %s1, %s182
          %s184 = sshll.u32 %s177, 4
          %s185 = int_to_ptr.vmem [resolvable:$true] %s184
          %190 = dma.hbm_to_vmem [thread:$0]  %s183, 256, %s185, %s174, 128, 128, 8
        $region28: #{tpu_custom_call.1} parent=19 // pred_fallthru
          _
      $region20: #{tpu_custom_call.1} parent=5 // pred_fallthru
        _
      %p191 = scmp.le.s32.totalorder 1, %s18
      %p192 = scmp.lt.s32.totalorder %s18, 5
      %p193 = pnand %p191, %p192
      %p194 = pneg %p193
      // Predicated region
      $region29: #{tpu_custom_call.1} parent=5 // pred_check
        _
      $region30: #{tpu_custom_call.1} parent=5 // pred_check_branch
        %196 = sbr.rel (%p193) target = $region32
      $region31: #{tpu_custom_call.1} parent=5 // pred_region
        %s197 = ssub.s32 %s18, 1
        %s198 = sand.u32 %s31, 1
        %s199 = scalar_lea.sflag [#allocation3], %s198
        %s200 = sand.u32 %s31, 1
        %s201 = smul.addr %s200, 16
        %s202 = scalar_lea.vmem [#allocation2], %s201
        // Predicated region
        $region33: #{tpu_custom_call.1} parent=31 // pred_check
          %p203 = pneg %p44
        $region34: #{tpu_custom_call.1} parent=31 // pred_check_branch
          %205 = sbr.rel (%p203) target = $region36
        $region35: #{tpu_custom_call.1} parent=31 // pred_region
          %206 = dma.done %s199, 256
        $region36: #{tpu_custom_call.1} parent=31 // pred_fallthru
          _
        %s207 = sand.u32 %s23, 1
        %s208 = scalar_lea.sflag [#allocation6], %s207
        %s209 = sand.u32 %s57, 1
        %s210 = smul.addr %s209, 16
        %s211 = scalar_lea.vmem [#allocation5], %s210
        // Predicated region
        $region37: #{tpu_custom_call.1} parent=31 // pred_check
          %p212 = pneg %p70
        $region38: #{tpu_custom_call.1} parent=31 // pred_check_branch
          %214 = sbr.rel (%p212) target = $region40
        $region39: #{tpu_custom_call.1} parent=31 // pred_region
          %215 = dma.done %s208, 256
        $region40: #{tpu_custom_call.1} parent=31 // pred_fallthru
          _
        // Predicated region
        $region41: #{tpu_custom_call.1} parent=31 // pred_check
          %p216 = pneg %p91
        $region42: #{tpu_custom_call.1} parent=31 // pred_check_branch
          %218 = sbr.rel (%p216) target = $region44
        $region43: #{tpu_custom_call.1} parent=31 // pred_region
          %219 = dma.done [#allocation6], 2048
        $region44: #{tpu_custom_call.1} parent=31 // pred_fallthru
          _
        %s220 = sand.u32 %s31, 1
        %s221 = scalar_lea.sflag [#allocation3], %s220
        %s222 = sand.u32 %s31, 1
        %s223 = smul.addr %s222, 16
        %s224 = scalar_lea.vmem [#allocation2], %s223
        %p225 = pneg %p44
        %p226 = pneg %p41
        %s227 = sand.u32 %s23, 1
        %s228 = scalar_lea.sflag [#allocation6], %s227
        %s229 = sand.u32 %s57, 1
        %s230 = smul.addr %s229, 16
        %s231 = scalar_lea.vmem [#allocation5], %s230
        %p232 = pneg %p70
        %p233 = pneg %p67
        %p234 = pneg %p91
        %p235 = pneg %p88
        %p236 = pneg %p117
        %p237 = pneg %p114
        %s238 = sand.u32 %s104, 1
        %s239 = scalar_lea.sflag [#allocation4], %s238
        %s240 = sand.u32 %s104, 1
        %s241 = smul.addr %s240, 8
        %s242 = scalar_lea.vmem [#allocation8], %s241
        %s243 = smul.u32 2, %s23
        %s244 = smul.u32 2, %s23
        %v245 = vld [vmem:[%s202] sm:$0xff]
        %v246 = vld [vmem:[%s202 + $0x8] sm:$0xff]
        %v247 = vld [vmem:[%s211] sm:$0xff]
        %v248 = vld [vmem:[%s211 + $0x8] sm:$0xff]
        %v249 = vld [vmem:[#allocation7] sm:$0xff]
        %v250 = vld [vmem:[#allocation7 + $0x8] sm:$0xff]
        %v251 = vld [vmem:[#allocation7 + $0x10] sm:$0xff]
        %v252 = vld [vmem:[#allocation7 + $0x18] sm:$0xff]
        %v253 = vld [vmem:[#allocation7 + $0x20] sm:$0xff]
        %v254 = vld [vmem:[#allocation7 + $0x28] sm:$0xff]
        %v255 = vld [vmem:[#allocation7 + $0x30] sm:$0xff]
        %v256 = vld [vmem:[#allocation7 + $0x38] sm:$0xff]
        %v257 = vld [vmem:[#allocation7 + $0x40] sm:$0xff]
        %v258 = vld [vmem:[#allocation7 + $0x48] sm:$0xff]
        %v259 = vld [vmem:[#allocation7 + $0x50] sm:$0xff]
        %v260 = vld [vmem:[#allocation7 + $0x58] sm:$0xff]
        %v261 = vld [vmem:[#allocation7 + $0x60] sm:$0xff]
        %v262 = vld [vmem:[#allocation7 + $0x68] sm:$0xff]
        %v263 = vld [vmem:[#allocation7 + $0x70] sm:$0xff]
        %v264 = vld [vmem:[#allocation7 + $0x78] sm:$0xff]
        %v265 = vsub.f32 1.0, %v245
        %v266 = vsub.f32 1.0, %v246
        %v267 = vadd.f32 %v265, 1e-05
        %v268 = vadd.f32 %v266, 1e-05
        %v269 = vlog2.pop %v267
        %v270 = vmul.f32 %v269, 0.6931472
        %v271 = vlog2.pop %v268
        %v272 = vmul.f32 %v271, 0.6931472
        %v273 = vsub.f32 1.0, %v247
        %v274 = vsub.f32 1.0, %v248
        %v275 = vmul.f32 %v270, %v273
        %v276 = vmul.f32 %v272, %v274
        %277 = vmatprep.subr.mxu0 0.0
        %278 = vmatpush1.xpose.msra.mxu0 %v264
        %279 = vmatprep.subr.mxu0 0.0
        %280 = vmatpush1.xpose.msra.mxu0 %v263
        %281 = vmatprep.subr.mxu0 0.0
        %282 = vmatpush1.xpose.msra.mxu0 %v262
        %283 = vmatprep.subr.mxu0 0.0
        %284 = vmatpush1.xpose.msra.mxu0 %v261
        %285 = vmatprep.subr.mxu0 0.0
        %286 = vmatpush1.xpose.msra.mxu0 %v260
        %287 = vmatprep.subr.mxu0 0.0
        %288 = vmatpush1.xpose.msra.mxu0 %v259
        %289 = vmatprep.subr.mxu0 0.0
        %290 = vmatpush1.xpose.msra.mxu0 %v258
        %291 = vmatprep.subr.mxu0 0.0
        %292 = vmatpush1.xpose.msra.mxu0 %v257
        %293 = vmatprep.subr.mxu0 0.0
        %294 = vmatpush1.xpose.msra.mxu0 %v256
        %295 = vmatprep.subr.mxu0 0.0
        %296 = vmatpush1.xpose.msra.mxu0 %v255
        %297 = vmatprep.subr.mxu0 0.0
        %298 = vmatpush1.xpose.msra.mxu0 %v254
        %299 = vmatprep.subr.mxu0 0.0
        %300 = vmatpush1.xpose.msra.mxu0 %v253
        %301 = vmatprep.subr.mxu0 0.0
        %302 = vmatpush1.xpose.msra.mxu0 %v252
        %303 = vmatprep.subr.mxu0 0.0
        %304 = vmatpush1.xpose.msra.mxu0 %v251
        %305 = vmatprep.subr.mxu0 0.0
        %306 = vmatpush1.xpose.msra.mxu0 %v250
        %307 = vmatprep.subr.mxu0 0.0
        %308 = vmatpush1.xpose.msra.mxu0 %v249
        %309 = vmatprep.subr.mxu0 0.0
        %310 = vmatpush2.xpose.msra.mxu0 0.0
        %311 = vmatprep.subr.mxu0 0.0
        %312 = vmatpush2.xpose.msra.mxu0 0.0
        %313 = vmatprep.subr.mxu0 0.0
        %314 = vmatpush2.xpose.msra.mxu0 0.0
        %315 = vmatprep.subr.mxu0 0.0
        %316 = vmatpush2.xpose.msra.mxu0 0.0
        %317 = vmatprep.subr.mxu0 0.0
        %318 = vmatpush2.xpose.msra.mxu0 0.0
        %319 = vmatprep.subr.mxu0 0.0
        %320 = vmatpush2.xpose.msra.mxu0 0.0
        %321 = vmatprep.subr.mxu0 0.0
        %322 = vmatpush2.xpose.msra.mxu0 0.0
        %323 = vmatprep.subr.mxu0 0.0
        %324 = vmatpush2.xpose.msra.mxu0 0.0
        %325 = vmatprep.subr.mxu0 0.0
        %326 = vmatpush2.xpose.msra.mxu0 0.0
        %327 = vmatprep.subr.mxu0 0.0
        %328 = vmatpush2.xpose.msra.mxu0 0.0
        %329 = vmatprep.subr.mxu0 0.0
        %330 = vmatpush2.xpose.msra.mxu0 0.0
        %331 = vmatprep.subr.mxu0 0.0
        %332 = vmatpush2.xpose.msra.mxu0 0.0
        %333 = vmatprep.subr.mxu0 0.0
        %334 = vmatpush2.xpose.msra.mxu0 0.0
        %335 = vmatprep.subr.mxu0 0.0
        %336 = vmatpush2.xpose.msra.mxu0 0.0
        %337 = vmatprep.subr.mxu0 0.0
        %338 = vmatpush2.xpose.msra.mxu0 0.0
        %339 = vmatprep.subr.mxu0 0.0
        %340 = vmatpush2.xpose.msra.mxu0 0.0
        %341 = vmatprep.mubr.f32.mxu0 0.0
        %342 = vmatmul.mubr.f32.gmra.mxu0 %v275
        %v343 = vpop.f32.mrf.mxu0
        %v344 = vadd.f32 0.0, %v343
        %v345 = vpop.f32.mrf.mxu0
        %346 = vmatprep.mubr.f32.mxu0 0.0
        %347 = vmatmul.mubr.f32.gmra.mxu0 %v276
        %v348 = vpop.f32.mrf.mxu0
        %v349 = vadd.f32 0.0, %v348
        %v350 = vpop.f32.mrf.mxu0
        %351 = vdwg.mxu0
        %v352 = vsub.f32 0.0, %v344
        %v353 = vsub.f32 0.0, %v349
        %v354 = vmul.f32 %v352, %v247
        %v355 = vmul.f32 %v353, %v248
        %356 = vadd.xlane.f32.xlu0 %v354
        %v357 = vpop.xlane.xlu0 %356
        %358 = vadd.xlane.f32.xlu0 %v355
        %v359 = vpop.xlane.xlu0 %358
        %vm360 = vcmp.gt.f32.partialorder %v354, 0.0
        %vm361 = vcmp.gt.f32.partialorder %v355, 0.0
        %v362 = vsel %vm360, 1, 0
        %v363 = vsel %vm361, 1, 0
        %v364 = vcvt.s32.f32 %v362
        %v365 = vcvt.s32.f32 %v363
        %366 = vadd.xlane.f32.xlu0 %v364
        %v367 = vpop.xlane.xlu0 %366
        %368 = vadd.xlane.f32.xlu0 %v365
        %v369 = vpop.xlane.xlu0 %368
        %vm370 = vcmp.gt.f32.partialorder %v357, 0.0
        %vm371 = vcmp.gt.f32.partialorder %v359, 0.0
        %v372 = vsel %vm370, %v367, 1.0
        %v373 = vsel %vm371, %v369, 1.0
        %v374 = vrcp.pop %v372
        %v375 = vmul.f32 %v357, %v374
        %v376 = vrcp.pop %v373
        %v377 = vmul.f32 %v359, %v376
        %v378 = vsel %vm370, %v375, 0.0
        %v379 = vsel %vm371, %v377, 0.0
        %v380 = vadd.f32 %v378, %v379
        %v381 = vrot.slane %v380, 4
        %v382 = vadd.f32 %v380, %v381
        %v383 = vrot.slane %v382, 2
        %v384 = vadd.f32 %v382, %v383
        %v385 = vrot.slane %v384, 1
        %v386 = vadd.f32 %v384, %v385
        %v387 = vsel %vm370, 1, 0
        %v388 = vsel %vm371, 1, 0
        %v389 = vcvt.s32.f32 %v387
        %v390 = vcvt.s32.f32 %v388
        %v391 = vadd.f32 %v389, %v390
        %v392 = vrot.slane %v391, 4
        %v393 = vadd.f32 %v391, %v392
        %v394 = vrot.slane %v393, 2
        %v395 = vadd.f32 %v393, %v394
        %v396 = vrot.slane %v395, 1
        %v397 = vadd.f32 %v395, %v396
        %v398 = vlaneseq
        %v399 = vshrl.u32 %v398, 7
        %vm400 = vcmp.eq.s32.totalorder %v399, 0
        %vm401 = vcmp.eq.s32.totalorder %v399, 1
        %v402 = vsel %vm401, %v397, 0.0
        %v403 = vsel %vm400, %v386, %v402
        %404 = vst [vmem:[%s242] sm:$0xff] %v403
        %s405 = sand.u32 %s104, 1
        %s406 = scalar_lea.sflag [#allocation4], %s405
        %s407 = sand.u32 %s104, 1
        %s408 = smul.addr %s407, 8
        %s409 = scalar_lea.vmem [#allocation8], %s408
        // Predicated region
        $region45: #{tpu_custom_call.1} parent=31 // pred_check
          %p410 = pneg %p114
        $region46: #{tpu_custom_call.1} parent=31 // pred_check_branch
          %412 = sbr.rel (%p410) target = $region48
        $region47: #{tpu_custom_call.1} parent=31 // pred_region
          %s414 = ssub.s32 128, 128
          %415 = vsyncadd %s406, %s414
          %s416 = smul.addr %s23, 128
          %s417 = scalar_lea.hbm %s3, %s416
          %s419 = sshll.u32 %s409, 4
          %s420 = int_to_ptr.vmem [resolvable:$true] %s419
          %422 = dma.vmem_to_hbm [thread:$0]  %s420, 128, %s417, %s406
        $region48: #{tpu_custom_call.1} parent=31 // pred_fallthru
          _
      $region32: #{tpu_custom_call.1} parent=5 // pred_fallthru
        _
      %p423 = scmp.le.s32.totalorder 2, %s18
      // Predicated region
      $region49: #{tpu_custom_call.1} parent=5 // pred_check
        %p424 = pneg %p423
      $region50: #{tpu_custom_call.1} parent=5 // pred_check_branch
        %426 = sbr.rel (%p424) target = $region52
      $region51: #{tpu_custom_call.1} parent=5 // pred_region
        %s427 = ssub.s32 %s18, 2
        // Predicated region
        $region53: #{tpu_custom_call.1} parent=51 // pred_check
          %p428 = pneg %p120
        $region54: #{tpu_custom_call.1} parent=51 // pred_check_branch
          %430 = sbr.rel (%p428) target = $region56
        $region55: #{tpu_custom_call.1} parent=51 // pred_region
          %s431 = sand.u32 %s105, 1
          %s432 = scalar_lea.sflag [#allocation4], %s431
          %s433 = sand.u32 %s105, 1
          %s434 = smul.addr %s433, 8
          %s435 = scalar_lea.vmem [#allocation8], %s434
          %436 = dma.done %s432, 128
        $region56: #{tpu_custom_call.1} parent=51 // pred_fallthru
          _
      $region52: #{tpu_custom_call.1} parent=5 // pred_fallthru
        _
    $region6: #{tpu_custom_call.1} parent=1 // loop_footer
      %s22 = sadd.s32 1, %s18
    $region7: #{tpu_custom_call.1} parent=1 // loop_footer_branch
      %17 = sbr.rel target = $region3
    $region8: #{tpu_custom_call.1} parent=1 // loop_exit
      _
    %437 = vsyncpa [#allocation3], 1
    %s438 = scalar_lea.sflag [#allocation3], 1
    %439 = vsyncpa %s438, 1
    %440 = vsyncpa [#allocation6], 1
    %s441 = scalar_lea.sflag [#allocation6], 1
    %442 = vsyncpa %s441, 1
    %443 = vsyncpa [#allocation4], 1
    %s444 = scalar_lea.sflag [#allocation4], 1
    %445 = vsyncpa %s444, 1

</llo_original>
